<compile_context>
chip_gen: v7x
topology: tpu7x:2x2x1
jax: 0.10.0
libtpu: 0.0.40
codegen_flags: <defaults>
</compile_context>

<pallas_src>
import numpy as np
import jax
import jax.numpy as jnp
from jax.experimental import pallas as pl
from jax.experimental.pallas import tpu as pltpu


def _round_up(v: int, m: int) -> int:
    return (v + m - 1) // m * m


# Working-set target and scoped-VMEM limit chosen to be safe on every
# generation: v5e/v6e have 128 MiB physical (16/32 MiB scoped defaults),
# v7x has 64 MiB physical per TensorCore.
_VMEM_BUDGET_BYTES = 16 * 1024 * 1024
_VMEM_LIMIT_BYTES = 32 * 1024 * 1024


def _mul_pairs_kernel(sel_ref, x_ref, o_ref):
    # sel_ref: (2, in_dim, out_dim) f32 one-hot selection matrices, VMEM-resident
    #          (constant index_map -> DMA'd once, reused every grid step)
    # x_ref:   (tb, in_dim) batch tile
    # o_ref:   (tb, out_dim) output tile (out_dim == full array dim, unpadded)
    x = x_ref[...].astype(jnp.float32)
    # One-hot matmul == exact column gather; HIGHEST keeps f32 x exact on the
    # bf16-native MXU.  Cost is irrelevant here: the kernel is HBM-write bound.
    a = jnp.dot(x, sel_ref[0], preferred_element_type=jnp.float32,
                precision=jax.lax.Precision.HIGHEST)        # x[:, idx0]
    b = jnp.dot(x, sel_ref[1], preferred_element_type=jnp.float32,
                precision=jax.lax.Precision.HIGHEST)        # x[:, idx1]
    o_ref[...] = (a * b).astype(o_ref.dtype)


def _pick_batch_tile(B: int, in_dim: int, out_dim: int, itemsize: int) -> int:
    """Largest batch tile (multiple of 8) whose pipelined working set fits the budget."""
    # Fixed cost: resident selection matrices (double-buffered by the pipeline).
    fixed = 2 * (2 * in_dim * out_dim * 4)
    # Per-row cost: double-buffered x tile + double-buffered out tile
    # + ~two out-tile rows of live f32 intermediates (a, b) inside the body.
    per_row = (2 * in_dim + 2 * out_dim) * itemsize + 2 * out_dim * 4
    avail = max(_VMEM_BUDGET_BYTES - fixed, 8 * per_row)
    tb = avail // per_row
    tb = min(tb, 2048)                  # diminishing returns past ~1-2k rows
    tb = min(tb, _round_up(B, 8))       # never tile past the batch
    tb = max(8, (tb // 8) * 8)          # multiple of 8 sublanes
    return int(tb)


def mul_pairs(x: jnp.ndarray) -> jnp.ndarray:
    """Pallas implementation of Mul.forward. x: (B, in_dim) float array."""
    B, in_dim = x.shape
    out_dim = in_dim * (in_dim + 1) // 2
    itemsize = jnp.dtype(x.dtype).itemsize
    tb = _pick_batch_tile(B, in_dim, out_dim, itemsize)

    # Upper-triangular index pairs, same row-major order as torch.triu_indices,
    # encoded as exact one-hot f32 gather matrices (built once on the host).
    i0, i1 = np.triu_indices(in_dim, k=0)
    sel = np.zeros((2, in_dim, out_dim), dtype=np.float32)
    sel[0, i0, np.arange(out_dim)] = 1.0
    sel[1, i1, np.arange(out_dim)] = 1.0
    sel = jnp.asarray(sel)

    cost = pl.CostEstimate(
        flops=2 * (2 * B * in_dim * out_dim) + B * out_dim,
        transcendentals=0,
        bytes_accessed=(B * in_dim + B * out_dim) * itemsize + sel.size * 4,
    )

    return pl.pallas_call(
        _mul_pairs_kernel,
        out_shape=jax.ShapeDtypeStruct((B, out_dim), x.dtype),
        grid=(pl.cdiv(B, tb),),
        in_specs=[
            # Constant block index -> fetched once, stays VMEM-resident.
            pl.BlockSpec((2, in_dim, out_dim), lambda b: (0, 0, 0)),
            pl.BlockSpec((tb, in_dim), lambda b: (b, 0)),
        ],
        # Last block dim == full array dim (no lane padding written to HBM).
        out_specs=pl.BlockSpec((tb, out_dim), lambda b: (b, 0)),
        compiler_params=pltpu.CompilerParams(
            dimension_semantics=("parallel",),       # megacore batch split
            vmem_limit_bytes=_VMEM_LIMIT_BYTES,
        ),
        cost_estimate=cost,
    )(sel, x)


def mul_pairs_ref(x: jnp.ndarray) -> jnp.ndarray:
    """Pure-JAX reference matching the PyTorch forward exactly."""
    in_dim = x.shape[1]
    i0, i1 = np.triu_indices(in_dim, k=0)
    return x[:, i0] * x[:, i1]


if __name__ == "__main__":
    key = jax.random.PRNGKey(0)
    B, in_dim = 8, 16                          # out_dim = 16*17//2 = 136
    x = jax.random.normal(key, (B, in_dim), dtype=jnp.float32)

    out = jax.block_until_ready(mul_pairs(x))
    ref = mul_pairs_ref(x)

    assert out.shape == (B, in_dim * (in_dim + 1) // 2), out.shape
    # One-hot HIGHEST-precision gather + f32 VPU multiply should match the
    # reference to the last bit; allow only a vanishing tolerance.
    np.testing.assert_allclose(np.asarray(out), np.asarray(ref), rtol=1e-6, atol=1e-12)

    print("KERNEL_OK")
</pallas_src>

<mosaic_0001>
module attributes {stable_mosaic.version = 11 : i64} {
  func.func @_mul_pairs_kernel(%arg0: i32, %arg1: memref<2x16x136xf32, #tpu.memory_space<vmem>>, %arg2: memref<8x16xf32, #tpu.memory_space<vmem>>, %arg3: memref<8x136xf32, #tpu.memory_space<vmem>>) attributes {dimension_semantics = [#tpu.dimension_semantics<parallel>], iteration_bounds = array<i64: 1>, scalar_prefetch = 0 : i64, scratch_operands = 0 : i64, tpu.core_type = #tpu.core_type<tc>, window_params = [{pipeline_mode = #tpu.pipeline_mode<synchronous>, transform_indices = @transform_0, window_bounds = array<i64: 2, 16, 136>}, {transform_indices = @transform_1, window_bounds = array<i64: 8, 16>}, {transform_indices = @transform_2, window_bounds = array<i64: 8, 136>}]} {
    %c0 = arith.constant 0 : index
    %c0_0 = arith.constant 0 : index
    %0 = vector.load %arg2[%c0, %c0_0] : memref<8x16xf32, #tpu.memory_space<vmem>>, vector<8x16xf32>
    %c0_1 = arith.constant 0 : index
    %c0_2 = arith.constant 0 : index
    %c0_3 = arith.constant 0 : index
    %1 = vector.load %arg1[%c0_1, %c0_2, %c0_3] : memref<2x16x136xf32, #tpu.memory_space<vmem>>, vector<1x16x136xf32>
    %2 = vector.shape_cast %1 : vector<1x16x136xf32> to vector<16x136xf32>
    %cst = arith.constant dense<0.000000e+00> : vector<8x136xf32>
    %3 = tpu.matmul %0, %2, %cst {dimension_numbers = #tpu.dot_dimension_numbers<[1], [0], [0], [1], [0, 0, 1, 1], [], []>, precision = #tpu.contract_precision<fp32>} : vector<8x16xf32>, vector<16x136xf32>, vector<8x136xf32> -> vector<8x136xf32>
    %c1 = arith.constant 1 : index
    %c0_4 = arith.constant 0 : index
    %c0_5 = arith.constant 0 : index
    %4 = vector.load %arg1[%c1, %c0_4, %c0_5] : memref<2x16x136xf32, #tpu.memory_space<vmem>>, vector<1x16x136xf32>
    %5 = vector.shape_cast %4 : vector<1x16x136xf32> to vector<16x136xf32>
    %cst_6 = arith.constant dense<0.000000e+00> : vector<8x136xf32>
    %6 = tpu.matmul %0, %5, %cst_6 {dimension_numbers = #tpu.dot_dimension_numbers<[1], [0], [0], [1], [0, 0, 1, 1], [], []>, precision = #tpu.contract_precision<fp32>} : vector<8x16xf32>, vector<16x136xf32>, vector<8x136xf32> -> vector<8x136xf32>
    %7 = arith.mulf %3, %6 : vector<8x136xf32>
    %c0_7 = arith.constant 0 : index
    %c0_8 = arith.constant 0 : index
    %8 = vector.load %arg3[%c0_7, %c0_8] : memref<8x136xf32, #tpu.memory_space<vmem>>, vector<8x136xf32>
    tpu.vector_store %arg3[%c0_7, %c0_8], %7 {strides = array<i32>} : memref<8x136xf32, #tpu.memory_space<vmem>>, vector<8x136xf32>,
    return
  }
  func.func @transform_0(%arg0: i32) -> (i32, i32, i32) {
    %c0_i32 = arith.constant 0 : i32
    %c0_i32_0 = arith.constant 0 : i32
    %c0_i32_1 = arith.constant 0 : i32
    %c0_i32_2 = arith.constant 0 : i32
    return %c0_i32, %c0_i32_0, %c0_i32_1 : i32, i32, i32
  }
  func.func @transform_1(%arg0: i32) -> (i32, i32) {
    %c0_i32 = arith.constant 0 : i32
    %c0_i32_0 = arith.constant 0 : i32
    return %arg0, %c0_i32 : i32, i32
  }
  func.func @transform_2(%arg0: i32) -> (i32, i32) {
    %c0_i32 = arith.constant 0 : i32
    %c0_i32_0 = arith.constant 0 : i32
    return %arg0, %c0_i32 : i32, i32
  }
}

</mosaic_0001>

<llo_original>
// kernel: tpu_custom_call.1
$region0: #{tpu_custom_call.1}
  #allocation0 [shape = 'u32[]', space=smem, size = 0x4, offset = 0x4, fixed_abs, tag = 'smem constant byte address 0x4 - core index']
  #allocation1 [shape = 'u32[144,128]{1,0:T(1,128)}', space=vmem, size = 0x12000, scoped, tag = 'internal scratch']
  %s0 = inlined_call_operand.hbm [shape: f32[2,16,136], index: 0, kind: input, shape index: {}]
  %s1 = inlined_call_operand.hbm [shape: f32[8,16], index: 1, kind: input, shape index: {}]
  %s2 = inlined_call_operand.hbm [shape: f32[8,136], index: 2, kind: output, shape index: {}]
  %s3 = sld [smem:[#allocation0]]
  $region26: #{tpu_custom_call.1} parent=0
    _
  %s5 = ssub.s32 1, %s3
  %s6 = scalar_select 0, %s5, %s3
  $region1: #{tpu_custom_call.1} parent=0
    #allocation2 [shape = 'u8[32768]{0}', space=vmem, size = 0x8000, scoped, tag = 'input window, operand 0, single buffered']
    #allocation3 [shape = 's32[1]{0}', space=sflag, size = 0x4, scoped, tag = 'scoped memory for tpu_custom_call.1']
    #allocation4 [shape = 's32[1]{0}', space=sflag, size = 0x4, scoped, tag = 'scoped memory for tpu_custom_call.1']
    #allocation5 [shape = 'u8[4096]{0}', space=vmem, size = 0x1000, scoped, tag = 'input window, operand 1, single buffered']
    #allocation6 [shape = 's32[1]{0}', space=sflag, size = 0x4, scoped, tag = 'scoped memory for tpu_custom_call.1']
    #allocation7 [shape = 'u8[8192]{0}', space=vmem, size = 0x2000, scoped, tag = 'output window, operand 0, single buffered']
    %7 = vsyncpa [#allocation3], 0
    %8 = vsyncpa [#allocation6], 0
    %9 = vsyncpa [#allocation4], 0
    // Predicated region
    $region2: #{tpu_custom_call.1} parent=1 // pred_check
      _
    $region3: #{tpu_custom_call.1} parent=1 // pred_check_branch
      %11 = sbr.rel (0) target = $region5
    $region4: #{tpu_custom_call.1} parent=1 // pred_region
      %s13 = ssub.s32 1024, 1024
      %14 = vsyncadd [#allocation3], %s13
      %s15 = sshll.u32 [#allocation2], 4
      %s16 = int_to_ptr.vmem [resolvable:$true] %s15
      %21 = dma.hbm_to_vmem [thread:$0]  %s0, 1024, %s16, [#allocation3], 256, 256, 16
    $region5: #{tpu_custom_call.1} parent=1 // pred_fallthru
      _
    // Predicated region
    $region6: #{tpu_custom_call.1} parent=1 // pred_check
      _
    $region7: #{tpu_custom_call.1} parent=1 // pred_check_branch
      %23 = sbr.rel (0) target = $region9
    $region8: #{tpu_custom_call.1} parent=1 // pred_region
      %s25 = ssub.s32 128, 128
      %26 = vsyncadd [#allocation6], %s25
      %s28 = sshll.u32 [#allocation5], 4
      %s29 = int_to_ptr.vmem [resolvable:$true] %s28
      %31 = dma.hbm_to_vmem [thread:$0]  %s1, 128, %s29, [#allocation6]
    $region9: #{tpu_custom_call.1} parent=1 // pred_fallthru
      _
    // Predicated region
    $region10: #{tpu_custom_call.1} parent=1 // pred_check
      _
    $region11: #{tpu_custom_call.1} parent=1 // pred_check_branch
      %33 = sbr.rel (0) target = $region13
    $region12: #{tpu_custom_call.1} parent=1 // pred_region
      %34 = dma.done [#allocation3], 1024
    $region13: #{tpu_custom_call.1} parent=1 // pred_fallthru
      _
    // Predicated region
    $region14: #{tpu_custom_call.1} parent=1 // pred_check
      _
    $region15: #{tpu_custom_call.1} parent=1 // pred_check_branch
      %36 = sbr.rel (0) target = $region17
    $region16: #{tpu_custom_call.1} parent=1 // pred_region
      %37 = dma.done [#allocation6], 128
    $region17: #{tpu_custom_call.1} parent=1 // pred_fallthru
      _
    %v38 = vld [vmem:[#allocation5] sm:$0xff]
    %v39 = vld [vmem:[#allocation2] sm:$0xff]
    %v40 = vld [vmem:[#allocation2 + $0x8] sm:$0xff]
    %v41 = vld [vmem:[#allocation2 + $0x10] sm:$0xff]
    %v42 = vld [vmem:[#allocation2 + $0x18] sm:$0xff]
    %vm43 = vcmask 130048
    %v45 = vsel %vm43, %v38, 0
    %v47 = vand.u32 %v40, 4294901760
    %48 = vmatprep.subr.mxu0 %v47
    %v49 = vand.u32 %v39, 4294901760
    %50 = vmatpush1.msra.mxu0 %v49
    %v51 = vand.u32 %v42, 4294901760
    %52 = vmatprep.subr.mxu0 %v51
    %v53 = vand.u32 %v41, 4294901760
    %54 = vmatpush1.msra.mxu0 %v53
    %55 = vmatprep.subr.mxu0 0.0
    %56 = vmatpush1.msra.mxu0 0.0
    %57 = vmatprep.subr.mxu0 0.0
    %58 = vmatpush1.msra.mxu0 0.0
    %59 = vmatprep.subr.mxu0 0.0
    %60 = vmatpush1.msra.mxu0 0.0
    %61 = vmatprep.subr.mxu0 0.0
    %62 = vmatpush1.msra.mxu0 0.0
    %63 = vmatprep.subr.mxu0 0.0
    %64 = vmatpush1.msra.mxu0 0.0
    %65 = vmatprep.subr.mxu0 0.0
    %66 = vmatpush1.msra.mxu0 0.0
    %67 = vmatprep.subr.mxu0 0.0
    %68 = vmatpush1.msra.mxu0 0.0
    %69 = vmatprep.subr.mxu0 0.0
    %70 = vmatpush1.msra.mxu0 0.0
    %71 = vmatprep.subr.mxu0 0.0
    %72 = vmatpush1.msra.mxu0 0.0
    %73 = vmatprep.subr.mxu0 0.0
    %74 = vmatpush1.msra.mxu0 0.0
    %75 = vmatprep.subr.mxu0 0.0
    %76 = vmatpush1.msra.mxu0 0.0
    %77 = vmatprep.subr.mxu0 0.0
    %78 = vmatpush1.msra.mxu0 0.0
    %79 = vmatprep.subr.mxu0 0.0
    %80 = vmatpush1.msra.mxu0 0.0
    %81 = vmatprep.subr.mxu0 0.0
    %82 = vmatpush1.msra.mxu0 0.0
    %83 = vmatprep.subr.mxu0 0.0
    %84 = vmatpush1.msra.mxu0 0.0
    %85 = vmatprep.subr.mxu0 0.0
    %86 = vmatpush1.msra.mxu0 0.0
    %87 = vmatprep.subr.mxu0 0.0
    %88 = vmatpush1.msra.mxu0 0.0
    %89 = vmatprep.subr.mxu0 0.0
    %90 = vmatpush1.msra.mxu0 0.0
    %91 = vmatprep.subr.mxu0 0.0
    %92 = vmatpush1.msra.mxu0 0.0
    %93 = vmatprep.subr.mxu0 0.0
    %94 = vmatpush1.msra.mxu0 0.0
    %95 = vmatprep.subr.mxu0 0.0
    %96 = vmatpush1.msra.mxu0 0.0
    %97 = vmatprep.subr.mxu0 0.0
    %98 = vmatpush1.msra.mxu0 0.0
    %99 = vmatprep.subr.mxu0 0.0
    %100 = vmatpush1.msra.mxu0 0.0
    %101 = vmatprep.subr.mxu0 0.0
    %102 = vmatpush1.msra.mxu0 0.0
    %103 = vmatprep.subr.mxu0 0.0
    %104 = vmatpush1.msra.mxu0 0.0
    %105 = vmatprep.subr.mxu0 0.0
    %106 = vmatpush1.msra.mxu0 0.0
    %107 = vmatprep.subr.mxu0 0.0
    %108 = vmatpush1.msra.mxu0 0.0
    %109 = vmatprep.subr.mxu0 0.0
    %110 = vmatpush1.msra.mxu0 0.0
    %111 = vmatprep.subr.mxu0 0.0
    %112 = vmatpush1.msra.mxu0 0.0
    %113 = vmatprep.subr.mxu0 0.0
    %114 = vmatpush1.msra.mxu0 0.0
    %115 = vmatprep.mubr.f32.mxu0 0.0
    %v116 = vand.u32 %v45, 4294901760
    %v117 = vsub.f32 %v45, %v116
    %v118 = vand.u32 %v117, 4294901760
    %v119 = vsub.f32 %v117, %v118
    %v120 = vand.u32 %v119, 4294901760
    %121 = vmatmul.mubr.f32.gmra.mrb[0].mxu0 %v120
    %v122 = vpop.f32.mrb[0].mxu0
    %v123 = vadd.f32 0.0, %v122
    %v124 = vpop.f32.mrb[0].mxu0
    %v125 = vadd.f32 0.0, %v124
    %126 = vdwg.mxu0
    %v127 = vand.u32 %v40, 4294901760
    %v128 = vsub.f32 %v40, %v127
    %v129 = vand.u32 %v128, 4294901760
    %v130 = vsub.f32 %v128, %v129
    %v131 = vand.u32 %v130, 4294901760
    %132 = vmatprep.subr.mxu0 %v131
    %v133 = vand.u32 %v39, 4294901760
    %v134 = vsub.f32 %v39, %v133
    %v135 = vand.u32 %v134, 4294901760
    %v136 = vsub.f32 %v134, %v135
    %v137 = vand.u32 %v136, 4294901760
    %138 = vmatpush1.msra.mxu0 %v137
    %v139 = vand.u32 %v42, 4294901760
    %v140 = vsub.f32 %v42, %v139
    %v141 = vand.u32 %v140, 4294901760
    %v142 = vsub.f32 %v140, %v141
    %v143 = vand.u32 %v142, 4294901760
    %144 = vmatprep.subr.mxu0 %v143
    %v145 = vand.u32 %v41, 4294901760
    %v146 = vsub.f32 %v41, %v145
    %v147 = vand.u32 %v146, 4294901760
    %v148 = vsub.f32 %v146, %v147
    %v149 = vand.u32 %v148, 4294901760
    %150 = vmatpush1.msra.mxu0 %v149
    %151 = vmatprep.subr.mxu0 0.0
    %152 = vmatpush1.msra.mxu0 0.0
    %153 = vmatprep.subr.mxu0 0.0
    %154 = vmatpush1.msra.mxu0 0.0
    %155 = vmatprep.subr.mxu0 0.0
    %156 = vmatpush1.msra.mxu0 0.0
    %157 = vmatprep.subr.mxu0 0.0
    %158 = vmatpush1.msra.mxu0 0.0
    %159 = vmatprep.subr.mxu0 0.0
    %160 = vmatpush1.msra.mxu0 0.0
    %161 = vmatprep.subr.mxu0 0.0
    %162 = vmatpush1.msra.mxu0 0.0
    %163 = vmatprep.subr.mxu0 0.0
    %164 = vmatpush1.msra.mxu0 0.0
    %165 = vmatprep.subr.mxu0 0.0
    %166 = vmatpush1.msra.mxu0 0.0
    %167 = vmatprep.subr.mxu0 0.0
    %168 = vmatpush1.msra.mxu0 0.0
    %169 = vmatprep.subr.mxu0 0.0
    %170 = vmatpush1.msra.mxu0 0.0
    %171 = vmatprep.subr.mxu0 0.0
    %172 = vmatpush1.msra.mxu0 0.0
    %173 = vmatprep.subr.mxu0 0.0
    %174 = vmatpush1.msra.mxu0 0.0
    %175 = vmatprep.subr.mxu0 0.0
    %176 = vmatpush1.msra.mxu0 0.0
    %177 = vmatprep.subr.mxu0 0.0
    %178 = vmatpush1.msra.mxu0 0.0
    %179 = vmatprep.subr.mxu0 0.0
    %180 = vmatpush1.msra.mxu0 0.0
    %181 = vmatprep.subr.mxu0 0.0
    %182 = vmatpush1.msra.mxu0 0.0
    %183 = vmatprep.subr.mxu0 0.0
    %184 = vmatpush1.msra.mxu0 0.0
    %185 = vmatprep.subr.mxu0 0.0
    %186 = vmatpush1.msra.mxu0 0.0
    %187 = vmatprep.subr.mxu0 0.0
    %188 = vmatpush1.msra.mxu0 0.0
    %189 = vmatprep.subr.mxu0 0.0
    %190 = vmatpush1.msra.mxu0 0.0
    %191 = vmatprep.subr.mxu0 0.0
    %192 = vmatpush1.msra.mxu0 0.0
    %193 = vmatprep.subr.mxu0 0.0
    %194 = vmatpush1.msra.mxu0 0.0
    %195 = vmatprep.subr.mxu0 0.0
    %196 = vmatpush1.msra.mxu0 0.0
    %197 = vmatprep.subr.mxu0 0.0
    %198 = vmatpush1.msra.mxu0 0.0
    %199 = vmatprep.subr.mxu0 0.0
    %200 = vmatpush1.msra.mxu0 0.0
    %201 = vmatprep.subr.mxu0 0.0
    %202 = vmatpush1.msra.mxu0 0.0
    %203 = vmatprep.subr.mxu0 0.0
    %204 = vmatpush1.msra.mxu0 0.0
    %205 = vmatprep.subr.mxu0 0.0
    %206 = vmatpush1.msra.mxu0 0.0
    %207 = vmatprep.subr.mxu0 0.0
    %208 = vmatpush1.msra.mxu0 0.0
    %209 = vmatprep.subr.mxu0 0.0
    %210 = vmatpush1.msra.mxu0 0.0
    %211 = vmatprep.mubr.f32.mxu0 0.0
    %v212 = vand.u32 %v45, 4294901760
    %213 = vmatmul.mubr.f32.gmra.mrb[0].mxu0 %v212
    %v214 = vpop.f32.mrb[0].mxu0
    %v215 = vadd.f32 %v123, %v214
    %v216 = vpop.f32.mrb[0].mxu0
    %v217 = vadd.f32 %v125, %v216
    %218 = vdwg.mxu0
    %v219 = vand.u32 %v40, 4294901760
    %v220 = vsub.f32 %v40, %v219
    %221 = vmatprep.subr.mxu0 %v220
    %v222 = vand.u32 %v39, 4294901760
    %v223 = vsub.f32 %v39, %v222
    %224 = vmatpush1.msra.mxu0 %v223
    %v225 = vand.u32 %v42, 4294901760
    %v226 = vsub.f32 %v42, %v225
    %227 = vmatprep.subr.mxu0 %v226
    %v228 = vand.u32 %v41, 4294901760
    %v229 = vsub.f32 %v41, %v228
    %230 = vmatpush1.msra.mxu0 %v229
    %231 = vmatprep.subr.mxu0 0.0
    %232 = vmatpush1.msra.mxu0 0.0
    %233 = vmatprep.subr.mxu0 0.0
    %234 = vmatpush1.msra.mxu0 0.0
    %235 = vmatprep.subr.mxu0 0.0
    %236 = vmatpush1.msra.mxu0 0.0
    %237 = vmatprep.subr.mxu0 0.0
    %238 = vmatpush1.msra.mxu0 0.0
    %239 = vmatprep.subr.mxu0 0.0
    %240 = vmatpush1.msra.mxu0 0.0
    %241 = vmatprep.subr.mxu0 0.0
    %242 = vmatpush1.msra.mxu0 0.0
    %243 = vmatprep.subr.mxu0 0.0
    %244 = vmatpush1.msra.mxu0 0.0
    %245 = vmatprep.subr.mxu0 0.0
    %246 = vmatpush1.msra.mxu0 0.0
    %247 = vmatprep.subr.mxu0 0.0
    %248 = vmatpush1.msra.mxu0 0.0
    %249 = vmatprep.subr.mxu0 0.0
    %250 = vmatpush1.msra.mxu0 0.0
    %251 = vmatprep.subr.mxu0 0.0
    %252 = vmatpush1.msra.mxu0 0.0
    %253 = vmatprep.subr.mxu0 0.0
    %254 = vmatpush1.msra.mxu0 0.0
    %255 = vmatprep.subr.mxu0 0.0
    %256 = vmatpush1.msra.mxu0 0.0
    %257 = vmatprep.subr.mxu0 0.0
    %258 = vmatpush1.msra.mxu0 0.0
    %259 = vmatprep.subr.mxu0 0.0
    %260 = vmatpush1.msra.mxu0 0.0
    %261 = vmatprep.subr.mxu0 0.0
    %262 = vmatpush1.msra.mxu0 0.0
    %263 = vmatprep.subr.mxu0 0.0
    %264 = vmatpush1.msra.mxu0 0.0
    %265 = vmatprep.subr.mxu0 0.0
    %266 = vmatpush1.msra.mxu0 0.0
    %267 = vmatprep.subr.mxu0 0.0
    %268 = vmatpush1.msra.mxu0 0.0
    %269 = vmatprep.subr.mxu0 0.0
    %270 = vmatpush1.msra.mxu0 0.0
    %271 = vmatprep.subr.mxu0 0.0
    %272 = vmatpush1.msra.mxu0 0.0
    %273 = vmatprep.subr.mxu0 0.0
    %274 = vmatpush1.msra.mxu0 0.0
    %275 = vmatprep.subr.mxu0 0.0
    %276 = vmatpush1.msra.mxu0 0.0
    %277 = vmatprep.subr.mxu0 0.0
    %278 = vmatpush1.msra.mxu0 0.0
    %279 = vmatprep.subr.mxu0 0.0
    %280 = vmatpush1.msra.mxu0 0.0
    %281 = vmatprep.subr.mxu0 0.0
    %282 = vmatpush1.msra.mxu0 0.0
    %283 = vmatprep.subr.mxu0 0.0
    %284 = vmatpush1.msra.mxu0 0.0
    %285 = vmatprep.subr.mxu0 0.0
    %286 = vmatpush1.msra.mxu0 0.0
    %287 = vmatprep.subr.mxu0 0.0
    %288 = vmatpush1.msra.mxu0 0.0
    %289 = vmatprep.subr.mxu0 0.0
    %290 = vmatpush1.msra.mxu0 0.0
    %291 = vmatprep.mubr.f32.mxu0 0.0
    %v292 = vand.u32 %v45, 4294901760
    %v293 = vsub.f32 %v45, %v292
    %294 = vmatmul.mubr.f32.gmra.mrb[0].mxu0 %v293
    %v295 = vpop.f32.mrb[0].mxu0
    %v296 = vadd.f32 %v215, %v295
    %v297 = vpop.f32.mrb[0].mxu0
    %v298 = vadd.f32 %v217, %v297
    %299 = vdwg.mxu0
    %v300 = vand.u32 %v40, 4294901760
    %301 = vmatprep.subr.mxu0 %v300
    %v302 = vand.u32 %v39, 4294901760
    %303 = vmatpush1.msra.mxu0 %v302
    %v304 = vand.u32 %v42, 4294901760
    %305 = vmatprep.subr.mxu0 %v304
    %v306 = vand.u32 %v41, 4294901760
    %307 = vmatpush1.msra.mxu0 %v306
    %308 = vmatprep.subr.mxu0 0.0
    %309 = vmatpush1.msra.mxu0 0.0
    %310 = vmatprep.subr.mxu0 0.0
    %311 = vmatpush1.msra.mxu0 0.0
    %312 = vmatprep.subr.mxu0 0.0
    %313 = vmatpush1.msra.mxu0 0.0
    %314 = vmatprep.subr.mxu0 0.0
    %315 = vmatpush1.msra.mxu0 0.0
    %316 = vmatprep.subr.mxu0 0.0
    %317 = vmatpush1.msra.mxu0 0.0
    %318 = vmatprep.subr.mxu0 0.0
    %319 = vmatpush1.msra.mxu0 0.0
    %320 = vmatprep.subr.mxu0 0.0
    %321 = vmatpush1.msra.mxu0 0.0
    %322 = vmatprep.subr.mxu0 0.0
    %323 = vmatpush1.msra.mxu0 0.0
    %324 = vmatprep.subr.mxu0 0.0
    %325 = vmatpush1.msra.mxu0 0.0
    %326 = vmatprep.subr.mxu0 0.0
    %327 = vmatpush1.msra.mxu0 0.0
    %328 = vmatprep.subr.mxu0 0.0
    %329 = vmatpush1.msra.mxu0 0.0
    %330 = vmatprep.subr.mxu0 0.0
    %331 = vmatpush1.msra.mxu0 0.0
    %332 = vmatprep.subr.mxu0 0.0
    %333 = vmatpush1.msra.mxu0 0.0
    %334 = vmatprep.subr.mxu0 0.0
    %335 = vmatpush1.msra.mxu0 0.0
    %336 = vmatprep.subr.mxu0 0.0
    %337 = vmatpush1.msra.mxu0 0.0
    %338 = vmatprep.subr.mxu0 0.0
    %339 = vmatpush1.msra.mxu0 0.0
    %340 = vmatprep.subr.mxu0 0.0
    %341 = vmatpush1.msra.mxu0 0.0
    %342 = vmatprep.subr.mxu0 0.0
    %343 = vmatpush1.msra.mxu0 0.0
    %344 = vmatprep.subr.mxu0 0.0
    %345 = vmatpush1.msra.mxu0 0.0
    %346 = vmatprep.subr.mxu0 0.0
    %347 = vmatpush1.msra.mxu0 0.0
    %348 = vmatprep.subr.mxu0 0.0
    %349 = vmatpush1.msra.mxu0 0.0
    %350 = vmatprep.subr.mxu0 0.0
    %351 = vmatpush1.msra.mxu0 0.0
    %352 = vmatprep.subr.mxu0 0.0
    %353 = vmatpush1.msra.mxu0 0.0
    %354 = vmatprep.subr.mxu0 0.0
    %355 = vmatpush1.msra.mxu0 0.0
    %356 = vmatprep.subr.mxu0 0.0
    %357 = vmatpush1.msra.mxu0 0.0
    %358 = vmatprep.subr.mxu0 0.0
    %359 = vmatpush1.msra.mxu0 0.0
    %360 = vmatprep.subr.mxu0 0.0
    %361 = vmatpush1.msra.mxu0 0.0
    %362 = vmatprep.subr.mxu0 0.0
    %363 = vmatpush1.msra.mxu0 0.0
    %364 = vmatprep.subr.mxu0 0.0
    %365 = vmatpush1.msra.mxu0 0.0
    %366 = vmatprep.subr.mxu0 0.0
    %367 = vmatpush1.msra.mxu0 0.0
    %368 = vmatprep.mubr.f32.mxu0 0.0
    %v369 = vand.u32 %v45, 4294901760
    %v370 = vsub.f32 %v45, %v369
    %v371 = vand.u32 %v370, 4294901760
    %372 = vmatmul.mubr.f32.gmra.mrb[0].mxu0 %v371
    %v373 = vpop.f32.mrb[0].mxu0
    %v374 = vadd.f32 %v296, %v373
    %v375 = vpop.f32.mrb[0].mxu0
    %v376 = vadd.f32 %v298, %v375
    %377 = vdwg.mxu0
    %v378 = vand.u32 %v40, 4294901760
    %v379 = vsub.f32 %v40, %v378
    %v380 = vand.u32 %v379, 4294901760
    %381 = vmatprep.subr.mxu0 %v380
    %v382 = vand.u32 %v39, 4294901760
    %v383 = vsub.f32 %v39, %v382
    %v384 = vand.u32 %v383, 4294901760
    %385 = vmatpush1.msra.mxu0 %v384
    %v386 = vand.u32 %v42, 4294901760
    %v387 = vsub.f32 %v42, %v386
    %v388 = vand.u32 %v387, 4294901760
    %389 = vmatprep.subr.mxu0 %v388
    %v390 = vand.u32 %v41, 4294901760
    %v391 = vsub.f32 %v41, %v390
    %v392 = vand.u32 %v391, 4294901760
    %393 = vmatpush1.msra.mxu0 %v392
    %394 = vmatprep.subr.mxu0 0.0
    %395 = vmatpush1.msra.mxu0 0.0
    %396 = vmatprep.subr.mxu0 0.0
    %397 = vmatpush1.msra.mxu0 0.0
    %398 = vmatprep.subr.mxu0 0.0
    %399 = vmatpush1.msra.mxu0 0.0
    %400 = vmatprep.subr.mxu0 0.0
    %401 = vmatpush1.msra.mxu0 0.0
    %402 = vmatprep.subr.mxu0 0.0
    %403 = vmatpush1.msra.mxu0 0.0
    %404 = vmatprep.subr.mxu0 0.0
    %405 = vmatpush1.msra.mxu0 0.0
    %406 = vmatprep.subr.mxu0 0.0
    %407 = vmatpush1.msra.mxu0 0.0
    %408 = vmatprep.subr.mxu0 0.0
    %409 = vmatpush1.msra.mxu0 0.0
    %410 = vmatprep.subr.mxu0 0.0
    %411 = vmatpush1.msra.mxu0 0.0
    %412 = vmatprep.subr.mxu0 0.0
    %413 = vmatpush1.msra.mxu0 0.0
    %414 = vmatprep.subr.mxu0 0.0
    %415 = vmatpush1.msra.mxu0 0.0
    %416 = vmatprep.subr.mxu0 0.0
    %417 = vmatpush1.msra.mxu0 0.0
    %418 = vmatprep.subr.mxu0 0.0
    %419 = vmatpush1.msra.mxu0 0.0
    %420 = vmatprep.subr.mxu0 0.0
    %421 = vmatpush1.msra.mxu0 0.0
    %422 = vmatprep.subr.mxu0 0.0
    %423 = vmatpush1.msra.mxu0 0.0
    %424 = vmatprep.subr.mxu0 0.0
    %425 = vmatpush1.msra.mxu0 0.0
    %426 = vmatprep.subr.mxu0 0.0
    %427 = vmatpush1.msra.mxu0 0.0
    %428 = vmatprep.subr.mxu0 0.0
    %429 = vmatpush1.msra.mxu0 0.0
    %430 = vmatprep.subr.mxu0 0.0
    %431 = vmatpush1.msra.mxu0 0.0
    %432 = vmatprep.subr.mxu0 0.0
    %433 = vmatpush1.msra.mxu0 0.0
    %434 = vmatprep.subr.mxu0 0.0
    %435 = vmatpush1.msra.mxu0 0.0
    %436 = vmatprep.subr.mxu0 0.0
    %437 = vmatpush1.msra.mxu0 0.0
    %438 = vmatprep.subr.mxu0 0.0
    %439 = vmatpush1.msra.mxu0 0.0
    %440 = vmatprep.subr.mxu0 0.0
    %441 = vmatpush1.msra.mxu0 0.0
    %442 = vmatprep.subr.mxu0 0.0
    %443 = vmatpush1.msra.mxu0 0.0
    %444 = vmatprep.subr.mxu0 0.0
    %445 = vmatpush1.msra.mxu0 0.0
    %446 = vmatprep.subr.mxu0 0.0
    %447 = vmatpush1.msra.mxu0 0.0
    %448 = vmatprep.subr.mxu0 0.0
    %449 = vmatpush1.msra.mxu0 0.0
    %450 = vmatprep.subr.mxu0 0.0
    %451 = vmatpush1.msra.mxu0 0.0
    %452 = vmatprep.subr.mxu0 0.0
    %453 = vmatpush1.msra.mxu0 0.0
    %454 = vmatprep.mubr.f32.mxu0 0.0
    %v455 = vand.u32 %v45, 4294901760
    %456 = vmatmul.mubr.f32.gmra.mrb[0].mxu0 %v455
    %v457 = vpop.f32.mrb[0].mxu0
    %v458 = vadd.f32 %v374, %v457
    %v459 = vpop.f32.mrb[0].mxu0
    %v460 = vadd.f32 %v376, %v459
    %461 = vdwg.mxu0
    %v462 = vand.u32 %v40, 4294901760
    %463 = vmatprep.subr.mxu0 %v462
    %v464 = vand.u32 %v39, 4294901760
    %465 = vmatpush1.msra.mxu0 %v464
    %v466 = vand.u32 %v42, 4294901760
    %467 = vmatprep.subr.mxu0 %v466
    %v468 = vand.u32 %v41, 4294901760
    %469 = vmatpush1.msra.mxu0 %v468
    %470 = vmatprep.subr.mxu0 0.0
    %471 = vmatpush1.msra.mxu0 0.0
    %472 = vmatprep.subr.mxu0 0.0
    %473 = vmatpush1.msra.mxu0 0.0
    %474 = vmatprep.subr.mxu0 0.0
    %475 = vmatpush1.msra.mxu0 0.0
    %476 = vmatprep.subr.mxu0 0.0
    %477 = vmatpush1.msra.mxu0 0.0
    %478 = vmatprep.subr.mxu0 0.0
    %479 = vmatpush1.msra.mxu0 0.0
    %480 = vmatprep.subr.mxu0 0.0
    %481 = vmatpush1.msra.mxu0 0.0
    %482 = vmatprep.subr.mxu0 0.0
    %483 = vmatpush1.msra.mxu0 0.0
    %484 = vmatprep.subr.mxu0 0.0
    %485 = vmatpush1.msra.mxu0 0.0
    %486 = vmatprep.subr.mxu0 0.0
    %487 = vmatpush1.msra.mxu0 0.0
    %488 = vmatprep.subr.mxu0 0.0
    %489 = vmatpush1.msra.mxu0 0.0
    %490 = vmatprep.subr.mxu0 0.0
    %491 = vmatpush1.msra.mxu0 0.0
    %492 = vmatprep.subr.mxu0 0.0
    %493 = vmatpush1.msra.mxu0 0.0
    %494 = vmatprep.subr.mxu0 0.0
    %495 = vmatpush1.msra.mxu0 0.0
    %496 = vmatprep.subr.mxu0 0.0
    %497 = vmatpush1.msra.mxu0 0.0
    %498 = vmatprep.subr.mxu0 0.0
    %499 = vmatpush1.msra.mxu0 0.0
    %500 = vmatprep.subr.mxu0 0.0
    %501 = vmatpush1.msra.mxu0 0.0
    %502 = vmatprep.subr.mxu0 0.0
    %503 = vmatpush1.msra.mxu0 0.0
    %504 = vmatprep.subr.mxu0 0.0
    %505 = vmatpush1.msra.mxu0 0.0
    %506 = vmatprep.subr.mxu0 0.0
    %507 = vmatpush1.msra.mxu0 0.0
    %508 = vmatprep.subr.mxu0 0.0
    %509 = vmatpush1.msra.mxu0 0.0
    %510 = vmatprep.subr.mxu0 0.0
    %511 = vmatpush1.msra.mxu0 0.0
    %512 = vmatprep.subr.mxu0 0.0
    %513 = vmatpush1.msra.mxu0 0.0
    %514 = vmatprep.subr.mxu0 0.0
    %515 = vmatpush1.msra.mxu0 0.0
    %516 = vmatprep.subr.mxu0 0.0
    %517 = vmatpush1.msra.mxu0 0.0
    %518 = vmatprep.subr.mxu0 0.0
    %519 = vmatpush1.msra.mxu0 0.0
    %520 = vmatprep.subr.mxu0 0.0
    %521 = vmatpush1.msra.mxu0 0.0
    %522 = vmatprep.subr.mxu0 0.0
    %523 = vmatpush1.msra.mxu0 0.0
    %524 = vmatprep.subr.mxu0 0.0
    %525 = vmatpush1.msra.mxu0 0.0
    %526 = vmatprep.subr.mxu0 0.0
    %527 = vmatpush1.msra.mxu0 0.0
    %528 = vmatprep.subr.mxu0 0.0
    %529 = vmatpush1.msra.mxu0 0.0
    %530 = vmatprep.mubr.f32.mxu0 0.0
    %v531 = vand.u32 %v45, 4294901760
    %532 = vmatmul.mubr.f32.gmra.mrb[0].mxu0 %v531
    %v533 = vpop.f32.mrb[0].mxu0
    %v534 = vadd.f32 %v458, %v533
    %v535 = vpop.f32.mrb[0].mxu0
    %v536 = vadd.f32 %v460, %v535
    %537 = vdwg.mxu0
    %s538 = scalar_lea.vmem [#allocation2], 32
    %v539 = vld [vmem:[%s538] sm:$0xff]
    %v540 = vld [vmem:[%s538 + $0x8] sm:$0xff]
    %v541 = vld [vmem:[%s538 + $0x10] sm:$0xff]
    %v542 = vld [vmem:[%s538 + $0x18] sm:$0xff]
    %v543 = vand.u32 %v540, 4294901760
    %544 = vmatprep.subr.mxu0 %v543
    %v545 = vand.u32 %v539, 4294901760
    %546 = vmatpush1.msra.mxu0 %v545
    %v547 = vand.u32 %v542, 4294901760
    %548 = vmatprep.subr.mxu0 %v547
    %v549 = vand.u32 %v541, 4294901760
    %550 = vmatpush1.msra.mxu0 %v549
    %551 = vmatprep.subr.mxu0 0.0
    %552 = vmatpush1.msra.mxu0 0.0
    %553 = vmatprep.subr.mxu0 0.0
    %554 = vmatpush1.msra.mxu0 0.0
    %555 = vmatprep.subr.mxu0 0.0
    %556 = vmatpush1.msra.mxu0 0.0
    %557 = vmatprep.subr.mxu0 0.0
    %558 = vmatpush1.msra.mxu0 0.0
    %559 = vmatprep.subr.mxu0 0.0
    %560 = vmatpush1.msra.mxu0 0.0
    %561 = vmatprep.subr.mxu0 0.0
    %562 = vmatpush1.msra.mxu0 0.0
    %563 = vmatprep.subr.mxu0 0.0
    %564 = vmatpush1.msra.mxu0 0.0
    %565 = vmatprep.subr.mxu0 0.0
    %566 = vmatpush1.msra.mxu0 0.0
    %567 = vmatprep.subr.mxu0 0.0
    %568 = vmatpush1.msra.mxu0 0.0
    %569 = vmatprep.subr.mxu0 0.0
    %570 = vmatpush1.msra.mxu0 0.0
    %571 = vmatprep.subr.mxu0 0.0
    %572 = vmatpush1.msra.mxu0 0.0
    %573 = vmatprep.subr.mxu0 0.0
    %574 = vmatpush1.msra.mxu0 0.0
    %575 = vmatprep.subr.mxu0 0.0
    %576 = vmatpush1.msra.mxu0 0.0
    %577 = vmatprep.subr.mxu0 0.0
    %578 = vmatpush1.msra.mxu0 0.0
    %579 = vmatprep.subr.mxu0 0.0
    %580 = vmatpush1.msra.mxu0 0.0
    %581 = vmatprep.subr.mxu0 0.0
    %582 = vmatpush1.msra.mxu0 0.0
    %583 = vmatprep.subr.mxu0 0.0
    %584 = vmatpush1.msra.mxu0 0.0
    %585 = vmatprep.subr.mxu0 0.0
    %586 = vmatpush1.msra.mxu0 0.0
    %587 = vmatprep.subr.mxu0 0.0
    %588 = vmatpush1.msra.mxu0 0.0
    %589 = vmatprep.subr.mxu0 0.0
    %590 = vmatpush1.msra.mxu0 0.0
    %591 = vmatprep.subr.mxu0 0.0
    %592 = vmatpush1.msra.mxu0 0.0
    %593 = vmatprep.subr.mxu0 0.0
    %594 = vmatpush1.msra.mxu0 0.0
    %595 = vmatprep.subr.mxu0 0.0
    %596 = vmatpush1.msra.mxu0 0.0
    %597 = vmatprep.subr.mxu0 0.0
    %598 = vmatpush1.msra.mxu0 0.0
    %599 = vmatprep.subr.mxu0 0.0
    %600 = vmatpush1.msra.mxu0 0.0
    %601 = vmatprep.subr.mxu0 0.0
    %602 = vmatpush1.msra.mxu0 0.0
    %603 = vmatprep.subr.mxu0 0.0
    %604 = vmatpush1.msra.mxu0 0.0
    %605 = vmatprep.subr.mxu0 0.0
    %606 = vmatpush1.msra.mxu0 0.0
    %607 = vmatprep.subr.mxu0 0.0
    %608 = vmatpush1.msra.mxu0 0.0
    %609 = vmatprep.subr.mxu0 0.0
    %610 = vmatpush1.msra.mxu0 0.0
    %611 = vmatprep.mubr.f32.mxu0 0.0
    %v612 = vand.u32 %v45, 4294901760
    %v613 = vsub.f32 %v45, %v612
    %v614 = vand.u32 %v613, 4294901760
    %v615 = vsub.f32 %v613, %v614
    %v616 = vand.u32 %v615, 4294901760
    %617 = vmatmul.mubr.f32.gmra.mrb[0].mxu0 %v616
    %v618 = vpop.f32.mrb[0].mxu0
    %v619 = vadd.f32 0.0, %v618
    %v620 = vpop.f32.mrb[0].mxu0
    %v621 = vadd.f32 0.0, %v620
    %622 = vdwg.mxu0
    %v623 = vand.u32 %v540, 4294901760
    %v624 = vsub.f32 %v540, %v623
    %v625 = vand.u32 %v624, 4294901760
    %v626 = vsub.f32 %v624, %v625
    %v627 = vand.u32 %v626, 4294901760
    %628 = vmatprep.subr.mxu0 %v627
    %v629 = vand.u32 %v539, 4294901760
    %v630 = vsub.f32 %v539, %v629
    %v631 = vand.u32 %v630, 4294901760
    %v632 = vsub.f32 %v630, %v631
    %v633 = vand.u32 %v632, 4294901760
    %634 = vmatpush1.msra.mxu0 %v633
    %v635 = vand.u32 %v542, 4294901760
    %v636 = vsub.f32 %v542, %v635
    %v637 = vand.u32 %v636, 4294901760
    %v638 = vsub.f32 %v636, %v637
    %v639 = vand.u32 %v638, 4294901760
    %640 = vmatprep.subr.mxu0 %v639
    %v641 = vand.u32 %v541, 4294901760
    %v642 = vsub.f32 %v541, %v641
    %v643 = vand.u32 %v642, 4294901760
    %v644 = vsub.f32 %v642, %v643
    %v645 = vand.u32 %v644, 4294901760
    %646 = vmatpush1.msra.mxu0 %v645
    %647 = vmatprep.subr.mxu0 0.0
    %648 = vmatpush1.msra.mxu0 0.0
    %649 = vmatprep.subr.mxu0 0.0
    %650 = vmatpush1.msra.mxu0 0.0
    %651 = vmatprep.subr.mxu0 0.0
    %652 = vmatpush1.msra.mxu0 0.0
    %653 = vmatprep.subr.mxu0 0.0
    %654 = vmatpush1.msra.mxu0 0.0
    %655 = vmatprep.subr.mxu0 0.0
    %656 = vmatpush1.msra.mxu0 0.0
    %657 = vmatprep.subr.mxu0 0.0
    %658 = vmatpush1.msra.mxu0 0.0
    %659 = vmatprep.subr.mxu0 0.0
    %660 = vmatpush1.msra.mxu0 0.0
    %661 = vmatprep.subr.mxu0 0.0
    %662 = vmatpush1.msra.mxu0 0.0
    %663 = vmatprep.subr.mxu0 0.0
    %664 = vmatpush1.msra.mxu0 0.0
    %665 = vmatprep.subr.mxu0 0.0
    %666 = vmatpush1.msra.mxu0 0.0
    %667 = vmatprep.subr.mxu0 0.0
    %668 = vmatpush1.msra.mxu0 0.0
    %669 = vmatprep.subr.mxu0 0.0
    %670 = vmatpush1.msra.mxu0 0.0
    %671 = vmatprep.subr.mxu0 0.0
    %672 = vmatpush1.msra.mxu0 0.0
    %673 = vmatprep.subr.mxu0 0.0
    %674 = vmatpush1.msra.mxu0 0.0
    %675 = vmatprep.subr.mxu0 0.0
    %676 = vmatpush1.msra.mxu0 0.0
    %677 = vmatprep.subr.mxu0 0.0
    %678 = vmatpush1.msra.mxu0 0.0
    %679 = vmatprep.subr.mxu0 0.0
    %680 = vmatpush1.msra.mxu0 0.0
    %681 = vmatprep.subr.mxu0 0.0
    %682 = vmatpush1.msra.mxu0 0.0
    %683 = vmatprep.subr.mxu0 0.0
    %684 = vmatpush1.msra.mxu0 0.0
    %685 = vmatprep.subr.mxu0 0.0
    %686 = vmatpush1.msra.mxu0 0.0
    %687 = vmatprep.subr.mxu0 0.0
    %688 = vmatpush1.msra.mxu0 0.0
    %689 = vmatprep.subr.mxu0 0.0
    %690 = vmatpush1.msra.mxu0 0.0
    %691 = vmatprep.subr.mxu0 0.0
    %692 = vmatpush1.msra.mxu0 0.0
    %693 = vmatprep.subr.mxu0 0.0
    %694 = vmatpush1.msra.mxu0 0.0
    %695 = vmatprep.subr.mxu0 0.0
    %696 = vmatpush1.msra.mxu0 0.0
    %697 = vmatprep.subr.mxu0 0.0
    %698 = vmatpush1.msra.mxu0 0.0
    %699 = vmatprep.subr.mxu0 0.0
    %700 = vmatpush1.msra.mxu0 0.0
    %701 = vmatprep.subr.mxu0 0.0
    %702 = vmatpush1.msra.mxu0 0.0
    %703 = vmatprep.subr.mxu0 0.0
    %704 = vmatpush1.msra.mxu0 0.0
    %705 = vmatprep.subr.mxu0 0.0
    %706 = vmatpush1.msra.mxu0 0.0
    %707 = vmatprep.mubr.f32.mxu0 0.0
    %v708 = vand.u32 %v45, 4294901760
    %709 = vmatmul.mubr.f32.gmra.mrb[0].mxu0 %v708
    %v710 = vpop.f32.mrb[0].mxu0
    %v711 = vadd.f32 %v619, %v710
    %v712 = vpop.f32.mrb[0].mxu0
    %v713 = vadd.f32 %v621, %v712
    %714 = vdwg.mxu0
    %v715 = vand.u32 %v540, 4294901760
    %v716 = vsub.f32 %v540, %v715
    %717 = vmatprep.subr.mxu0 %v716
    %v718 = vand.u32 %v539, 4294901760
    %v719 = vsub.f32 %v539, %v718
    %720 = vmatpush1.msra.mxu0 %v719
    %v721 = vand.u32 %v542, 4294901760
    %v722 = vsub.f32 %v542, %v721
    %723 = vmatprep.subr.mxu0 %v722
    %v724 = vand.u32 %v541, 4294901760
    %v725 = vsub.f32 %v541, %v724
    %726 = vmatpush1.msra.mxu0 %v725
    %727 = vmatprep.subr.mxu0 0.0
    %728 = vmatpush1.msra.mxu0 0.0
    %729 = vmatprep.subr.mxu0 0.0
    %730 = vmatpush1.msra.mxu0 0.0
    %731 = vmatprep.subr.mxu0 0.0
    %732 = vmatpush1.msra.mxu0 0.0
    %733 = vmatprep.subr.mxu0 0.0
    %734 = vmatpush1.msra.mxu0 0.0
    %735 = vmatprep.subr.mxu0 0.0
    %736 = vmatpush1.msra.mxu0 0.0
    %737 = vmatprep.subr.mxu0 0.0
    %738 = vmatpush1.msra.mxu0 0.0
    %739 = vmatprep.subr.mxu0 0.0
    %740 = vmatpush1.msra.mxu0 0.0
    %741 = vmatprep.subr.mxu0 0.0
    %742 = vmatpush1.msra.mxu0 0.0
    %743 = vmatprep.subr.mxu0 0.0
    %744 = vmatpush1.msra.mxu0 0.0
    %745 = vmatprep.subr.mxu0 0.0
    %746 = vmatpush1.msra.mxu0 0.0
    %747 = vmatprep.subr.mxu0 0.0
    %748 = vmatpush1.msra.mxu0 0.0
    %749 = vmatprep.subr.mxu0 0.0
    %750 = vmatpush1.msra.mxu0 0.0
    %751 = vmatprep.subr.mxu0 0.0
    %752 = vmatpush1.msra.mxu0 0.0
    %753 = vmatprep.subr.mxu0 0.0
    %754 = vmatpush1.msra.mxu0 0.0
    %755 = vmatprep.subr.mxu0 0.0
    %756 = vmatpush1.msra.mxu0 0.0
    %757 = vmatprep.subr.mxu0 0.0
    %758 = vmatpush1.msra.mxu0 0.0
    %759 = vmatprep.subr.mxu0 0.0
    %760 = vmatpush1.msra.mxu0 0.0
    %761 = vmatprep.subr.mxu0 0.0
    %762 = vmatpush1.msra.mxu0 0.0
    %763 = vmatprep.subr.mxu0 0.0
    %764 = vmatpush1.msra.mxu0 0.0
    %765 = vmatprep.subr.mxu0 0.0
    %766 = vmatpush1.msra.mxu0 0.0
    %767 = vmatprep.subr.mxu0 0.0
    %768 = vmatpush1.msra.mxu0 0.0
    %769 = vmatprep.subr.mxu0 0.0
    %770 = vmatpush1.msra.mxu0 0.0
    %771 = vmatprep.subr.mxu0 0.0
    %772 = vmatpush1.msra.mxu0 0.0
    %773 = vmatprep.subr.mxu0 0.0
    %774 = vmatpush1.msra.mxu0 0.0
    %775 = vmatprep.subr.mxu0 0.0
    %776 = vmatpush1.msra.mxu0 0.0
    %777 = vmatprep.subr.mxu0 0.0
    %778 = vmatpush1.msra.mxu0 0.0
    %779 = vmatprep.subr.mxu0 0.0
    %780 = vmatpush1.msra.mxu0 0.0
    %781 = vmatprep.subr.mxu0 0.0
    %782 = vmatpush1.msra.mxu0 0.0
    %783 = vmatprep.subr.mxu0 0.0
    %784 = vmatpush1.msra.mxu0 0.0
    %785 = vmatprep.subr.mxu0 0.0
    %786 = vmatpush1.msra.mxu0 0.0
    %787 = vmatprep.mubr.f32.mxu0 0.0
    %v788 = vand.u32 %v45, 4294901760
    %v789 = vsub.f32 %v45, %v788
    %790 = vmatmul.mubr.f32.gmra.mrb[0].mxu0 %v789
    %v791 = vpop.f32.mrb[0].mxu0
    %v792 = vadd.f32 %v711, %v791
    %v793 = vpop.f32.mrb[0].mxu0
    %v794 = vadd.f32 %v713, %v793
    %795 = vdwg.mxu0
    %v796 = vand.u32 %v540, 4294901760
    %797 = vmatprep.subr.mxu0 %v796
    %v798 = vand.u32 %v539, 4294901760
    %799 = vmatpush1.msra.mxu0 %v798
    %v800 = vand.u32 %v542, 4294901760
    %801 = vmatprep.subr.mxu0 %v800
    %v802 = vand.u32 %v541, 4294901760
    %803 = vmatpush1.msra.mxu0 %v802
    %804 = vmatprep.subr.mxu0 0.0
    %805 = vmatpush1.msra.mxu0 0.0
    %806 = vmatprep.subr.mxu0 0.0
    %807 = vmatpush1.msra.mxu0 0.0
    %808 = vmatprep.subr.mxu0 0.0
    %809 = vmatpush1.msra.mxu0 0.0
    %810 = vmatprep.subr.mxu0 0.0
    %811 = vmatpush1.msra.mxu0 0.0
    %812 = vmatprep.subr.mxu0 0.0
    %813 = vmatpush1.msra.mxu0 0.0
    %814 = vmatprep.subr.mxu0 0.0
    %815 = vmatpush1.msra.mxu0 0.0
    %816 = vmatprep.subr.mxu0 0.0
    %817 = vmatpush1.msra.mxu0 0.0
    %818 = vmatprep.subr.mxu0 0.0
    %819 = vmatpush1.msra.mxu0 0.0
    %820 = vmatprep.subr.mxu0 0.0
    %821 = vmatpush1.msra.mxu0 0.0
    %822 = vmatprep.subr.mxu0 0.0
    %823 = vmatpush1.msra.mxu0 0.0
    %824 = vmatprep.subr.mxu0 0.0
    %825 = vmatpush1.msra.mxu0 0.0
    %826 = vmatprep.subr.mxu0 0.0
    %827 = vmatpush1.msra.mxu0 0.0
    %828 = vmatprep.subr.mxu0 0.0
    %829 = vmatpush1.msra.mxu0 0.0
    %830 = vmatprep.subr.mxu0 0.0
    %831 = vmatpush1.msra.mxu0 0.0
    %832 = vmatprep.subr.mxu0 0.0
    %833 = vmatpush1.msra.mxu0 0.0
    %834 = vmatprep.subr.mxu0 0.0
    %835 = vmatpush1.msra.mxu0 0.0
    %836 = vmatprep.subr.mxu0 0.0
    %837 = vmatpush1.msra.mxu0 0.0
    %838 = vmatprep.subr.mxu0 0.0
    %839 = vmatpush1.msra.mxu0 0.0
    %840 = vmatprep.subr.mxu0 0.0
    %841 = vmatpush1.msra.mxu0 0.0
    %842 = vmatprep.subr.mxu0 0.0
    %843 = vmatpush1.msra.mxu0 0.0
    %844 = vmatprep.subr.mxu0 0.0
    %845 = vmatpush1.msra.mxu0 0.0
    %846 = vmatprep.subr.mxu0 0.0
    %847 = vmatpush1.msra.mxu0 0.0
    %848 = vmatprep.subr.mxu0 0.0
    %849 = vmatpush1.msra.mxu0 0.0
    %850 = vmatprep.subr.mxu0 0.0
    %851 = vmatpush1.msra.mxu0 0.0
    %852 = vmatprep.subr.mxu0 0.0
    %853 = vmatpush1.msra.mxu0 0.0
    %854 = vmatprep.subr.mxu0 0.0
    %855 = vmatpush1.msra.mxu0 0.0
    %856 = vmatprep.subr.mxu0 0.0
    %857 = vmatpush1.msra.mxu0 0.0
    %858 = vmatprep.subr.mxu0 0.0
    %859 = vmatpush1.msra.mxu0 0.0
    %860 = vmatprep.subr.mxu0 0.0
    %861 = vmatpush1.msra.mxu0 0.0
    %862 = vmatprep.subr.mxu0 0.0
    %863 = vmatpush1.msra.mxu0 0.0
    %864 = vmatprep.mubr.f32.mxu0 0.0
    %v865 = vand.u32 %v45, 4294901760
    %v866 = vsub.f32 %v45, %v865
    %v867 = vand.u32 %v866, 4294901760
    %868 = vmatmul.mubr.f32.gmra.mrb[0].mxu0 %v867
    %v869 = vpop.f32.mrb[0].mxu0
    %v870 = vadd.f32 %v792, %v869
    %v871 = vpop.f32.mrb[0].mxu0
    %v872 = vadd.f32 %v794, %v871
    %873 = vdwg.mxu0
    %v874 = vand.u32 %v540, 4294901760
    %v875 = vsub.f32 %v540, %v874
    %v876 = vand.u32 %v875, 4294901760
    %877 = vmatprep.subr.mxu0 %v876
    %v878 = vand.u32 %v539, 4294901760
    %v879 = vsub.f32 %v539, %v878
    %v880 = vand.u32 %v879, 4294901760
    %881 = vmatpush1.msra.mxu0 %v880
    %v882 = vand.u32 %v542, 4294901760
    %v883 = vsub.f32 %v542, %v882
    %v884 = vand.u32 %v883, 4294901760
    %885 = vmatprep.subr.mxu0 %v884
    %v886 = vand.u32 %v541, 4294901760
    %v887 = vsub.f32 %v541, %v886
    %v888 = vand.u32 %v887, 4294901760
    %889 = vmatpush1.msra.mxu0 %v888
    %890 = vmatprep.subr.mxu0 0.0
    %891 = vmatpush1.msra.mxu0 0.0
    %892 = vmatprep.subr.mxu0 0.0
    %893 = vmatpush1.msra.mxu0 0.0
    %894 = vmatprep.subr.mxu0 0.0
    %895 = vmatpush1.msra.mxu0 0.0
    %896 = vmatprep.subr.mxu0 0.0
    %897 = vmatpush1.msra.mxu0 0.0
    %898 = vmatprep.subr.mxu0 0.0
    %899 = vmatpush1.msra.mxu0 0.0
    %900 = vmatprep.subr.mxu0 0.0
    %901 = vmatpush1.msra.mxu0 0.0
    %902 = vmatprep.subr.mxu0 0.0
    %903 = vmatpush1.msra.mxu0 0.0
    %904 = vmatprep.subr.mxu0 0.0
    %905 = vmatpush1.msra.mxu0 0.0
    %906 = vmatprep.subr.mxu0 0.0
    %907 = vmatpush1.msra.mxu0 0.0
    %908 = vmatprep.subr.mxu0 0.0
    %909 = vmatpush1.msra.mxu0 0.0
    %910 = vmatprep.subr.mxu0 0.0
    %911 = vmatpush1.msra.mxu0 0.0
    %912 = vmatprep.subr.mxu0 0.0
    %913 = vmatpush1.msra.mxu0 0.0
    %914 = vmatprep.subr.mxu0 0.0
    %915 = vmatpush1.msra.mxu0 0.0
    %916 = vmatprep.subr.mxu0 0.0
    %917 = vmatpush1.msra.mxu0 0.0
    %918 = vmatprep.subr.mxu0 0.0
    %919 = vmatpush1.msra.mxu0 0.0
    %920 = vmatprep.subr.mxu0 0.0
    %921 = vmatpush1.msra.mxu0 0.0
    %922 = vmatprep.subr.mxu0 0.0
    %923 = vmatpush1.msra.mxu0 0.0
    %924 = vmatprep.subr.mxu0 0.0
    %925 = vmatpush1.msra.mxu0 0.0
    %926 = vmatprep.subr.mxu0 0.0
    %927 = vmatpush1.msra.mxu0 0.0
    %928 = vmatprep.subr.mxu0 0.0
    %929 = vmatpush1.msra.mxu0 0.0
    %930 = vmatprep.subr.mxu0 0.0
    %931 = vmatpush1.msra.mxu0 0.0
    %932 = vmatprep.subr.mxu0 0.0
    %933 = vmatpush1.msra.mxu0 0.0
    %934 = vmatprep.subr.mxu0 0.0
    %935 = vmatpush1.msra.mxu0 0.0
    %936 = vmatprep.subr.mxu0 0.0
    %937 = vmatpush1.msra.mxu0 0.0
    %938 = vmatprep.subr.mxu0 0.0
    %939 = vmatpush1.msra.mxu0 0.0
    %940 = vmatprep.subr.mxu0 0.0
    %941 = vmatpush1.msra.mxu0 0.0
    %942 = vmatprep.subr.mxu0 0.0
    %943 = vmatpush1.msra.mxu0 0.0
    %944 = vmatprep.subr.mxu0 0.0
    %945 = vmatpush1.msra.mxu0 0.0
    %946 = vmatprep.subr.mxu0 0.0
    %947 = vmatpush1.msra.mxu0 0.0
    %948 = vmatprep.subr.mxu0 0.0
    %949 = vmatpush1.msra.mxu0 0.0
    %950 = vmatprep.mubr.f32.mxu0 0.0
    %v951 = vand.u32 %v45, 4294901760
    %952 = vmatmul.mubr.f32.gmra.mrb[0].mxu0 %v951
    %v953 = vpop.f32.mrb[0].mxu0
    %v954 = vadd.f32 %v870, %v953
    %v955 = vpop.f32.mrb[0].mxu0
    %v956 = vadd.f32 %v872, %v955
    %957 = vdwg.mxu0
    %v958 = vand.u32 %v540, 4294901760
    %959 = vmatprep.subr.mxu0 %v958
    %v960 = vand.u32 %v539, 4294901760
    %961 = vmatpush1.msra.mxu0 %v960
    %v962 = vand.u32 %v542, 4294901760
    %963 = vmatprep.subr.mxu0 %v962
    %v964 = vand.u32 %v541, 4294901760
    %965 = vmatpush1.msra.mxu0 %v964
    %966 = vmatprep.subr.mxu0 0.0
    %967 = vmatpush1.msra.mxu0 0.0
    %968 = vmatprep.subr.mxu0 0.0
    %969 = vmatpush1.msra.mxu0 0.0
    %970 = vmatprep.subr.mxu0 0.0
    %971 = vmatpush1.msra.mxu0 0.0
    %972 = vmatprep.subr.mxu0 0.0
    %973 = vmatpush1.msra.mxu0 0.0
    %974 = vmatprep.subr.mxu0 0.0
    %975 = vmatpush1.msra.mxu0 0.0
    %976 = vmatprep.subr.mxu0 0.0
    %977 = vmatpush1.msra.mxu0 0.0
    %978 = vmatprep.subr.mxu0 0.0
    %979 = vmatpush1.msra.mxu0 0.0
    %980 = vmatprep.subr.mxu0 0.0
    %981 = vmatpush1.msra.mxu0 0.0
    %982 = vmatprep.subr.mxu0 0.0
    %983 = vmatpush1.msra.mxu0 0.0
    %984 = vmatprep.subr.mxu0 0.0
    %985 = vmatpush1.msra.mxu0 0.0
    %986 = vmatprep.subr.mxu0 0.0
    %987 = vmatpush1.msra.mxu0 0.0
    %988 = vmatprep.subr.mxu0 0.0
    %989 = vmatpush1.msra.mxu0 0.0
    %990 = vmatprep.subr.mxu0 0.0
    %991 = vmatpush1.msra.mxu0 0.0
    %992 = vmatprep.subr.mxu0 0.0
    %993 = vmatpush1.msra.mxu0 0.0
    %994 = vmatprep.subr.mxu0 0.0
    %995 = vmatpush1.msra.mxu0 0.0
    %996 = vmatprep.subr.mxu0 0.0
    %997 = vmatpush1.msra.mxu0 0.0
    %998 = vmatprep.subr.mxu0 0.0
    %999 = vmatpush1.msra.mxu0 0.0
    %1000 = vmatprep.subr.mxu0 0.0
    %1001 = vmatpush1.msra.mxu0 0.0
    %1002 = vmatprep.subr.mxu0 0.0
    %1003 = vmatpush1.msra.mxu0 0.0
    %1004 = vmatprep.subr.mxu0 0.0
    %1005 = vmatpush1.msra.mxu0 0.0
    %1006 = vmatprep.subr.mxu0 0.0
    %1007 = vmatpush1.msra.mxu0 0.0
    %1008 = vmatprep.subr.mxu0 0.0
    %1009 = vmatpush1.msra.mxu0 0.0
    %1010 = vmatprep.subr.mxu0 0.0
    %1011 = vmatpush1.msra.mxu0 0.0
    %1012 = vmatprep.subr.mxu0 0.0
    %1013 = vmatpush1.msra.mxu0 0.0
    %1014 = vmatprep.subr.mxu0 0.0
    %1015 = vmatpush1.msra.mxu0 0.0
    %1016 = vmatprep.subr.mxu0 0.0
    %1017 = vmatpush1.msra.mxu0 0.0
    %1018 = vmatprep.subr.mxu0 0.0
    %1019 = vmatpush1.msra.mxu0 0.0
    %1020 = vmatprep.subr.mxu0 0.0
    %1021 = vmatpush1.msra.mxu0 0.0
    %1022 = vmatprep.subr.mxu0 0.0
    %1023 = vmatpush1.msra.mxu0 0.0
    %1024 = vmatprep.subr.mxu0 0.0
    %1025 = vmatpush1.msra.mxu0 0.0
    %1026 = vmatprep.mubr.f32.mxu0 0.0
    %v1027 = vand.u32 %v45, 4294901760
    %1028 = vmatmul.mubr.f32.gmra.mrb[0].mxu0 %v1027
    %v1029 = vpop.f32.mrb[0].mxu0
    %v1030 = vadd.f32 %v954, %v1029
    %v1031 = vpop.f32.mrb[0].mxu0
    %v1032 = vadd.f32 %v956, %v1031
    %1033 = vdwg.mxu0
    %v1034 = vmul.f32 %v534, %v1030
    %v1035 = vmul.f32 %v536, %v1032
    %1036 = vst [vmem:[#allocation7] sm:$0xff] %v1034
    %vm1037 = vcmask 64512
    %1038 = vst.msk [vmem:[#allocation7 + $0x8] sm:$0xff] %vm1037, %v1035
    // Predicated region
    $region18: #{tpu_custom_call.1} parent=1 // pred_check
      _
    $region19: #{tpu_custom_call.1} parent=1 // pred_check_branch
      %1040 = sbr.rel (0) target = $region21
    $region20: #{tpu_custom_call.1} parent=1 // pred_region
      %s1042 = ssub.s32 256, 256
      %1043 = vsyncadd [#allocation4], %s1042
      %s1045 = sshll.u32 [#allocation7], 4
      %s1046 = int_to_ptr.vmem [resolvable:$true] %s1045
      %1048 = dma.vmem_to_hbm [thread:$0]  %s1046, 256, %s2, [#allocation4]
    $region21: #{tpu_custom_call.1} parent=1 // pred_fallthru
      _
    // Predicated region
    $region22: #{tpu_custom_call.1} parent=1 // pred_check
      _
    $region23: #{tpu_custom_call.1} parent=1 // pred_check_branch
      %1050 = sbr.rel (0) target = $region25
    $region24: #{tpu_custom_call.1} parent=1 // pred_region
      %1051 = dma.done [#allocation4], 256
    $region25: #{tpu_custom_call.1} parent=1 // pred_fallthru
      _
    %1052 = vsyncpa [#allocation3], 1
    %1053 = vsyncpa [#allocation6], 1
    %1054 = vsyncpa [#allocation4], 1

</llo_original>
